<compile_context>
chip_gen: v5e
topology: v5e:2x2
jax: 0.10.0
libtpu: 0.0.40
codegen_flags: <defaults>
</compile_context>

<pallas_src>
import functools

import jax
import jax.numpy as jnp
from jax.experimental import pallas as pl
from jax.experimental.pallas import tpu as pltpu

_EPS = 1e-6  # torch.nn.functional.pairwise_distance default eps


def _col_to_row(col):
    """(n, 1) column -> (1, n) lane-dense row.

    Uses only iota / where / sublane-sum (guaranteed Mosaic lowering, exact f32),
    avoiding transpose/reshape relayouts and matmul precision concerns.
    """
    n = col.shape[0]
    rows = jax.lax.broadcasted_iota(jnp.int32, (n, n), 0)
    cols = jax.lax.broadcasted_iota(jnp.int32, (n, n), 1)
    scat = jnp.where(rows == cols, col, jnp.float32(0.0))      # (n, n)
    return jnp.sum(scat, axis=0, keepdims=True)                # (1, n)


def _contrastive_loss_kernel(params_ref, out1_ref, vecs_ref, anc_ref, loss_ref,
                             *, n_vectors, d_feat, shared_vectors):
    # params_ref: (1, 4, TB) f32 VMEM   rows: [alpha, label, v, margin], samples on lanes
    # out1_ref:   (1, TB, D)  VMEM      query embeddings
    # vecs_ref:   (N, D) or (1, TB, N, D) VMEM   reference vectors
    # anc_ref:    (1, TB, D)  VMEM      anchor embeddings
    # loss_ref:   (1, 1, TB)  VMEM      lane-dense per-sample loss
    out1 = out1_ref[0].astype(jnp.float32)                     # (TB, D)
    anc = anc_ref[0].astype(jnp.float32)                       # (TB, D)
    params = params_ref[0]                                     # (4, TB)

    if shared_vectors:
        vecs = vecs_ref[...].astype(jnp.float32)               # (N, D)
        diffs = out1[:, None, :] - vecs[None, :, :] + _EPS     # (TB, N, D)
    else:
        vecs = vecs_ref[0].astype(jnp.float32)                 # (TB, N, D)
        diffs = out1[:, None, :] - vecs + _EPS                 # (TB, N, D)

    # Exact f32 lane reductions over the feature dim.
    d_each = jnp.sqrt(jnp.sum(diffs * diffs, axis=-1))         # (TB, N)
    d_vec_col = jnp.sum(d_each, axis=-1, keepdims=True)        # (TB, 1)

    da = out1 - anc + _EPS                                     # (TB, D)
    d_anc_col = jnp.sqrt(jnp.sum(da * da, axis=-1, keepdims=True))   # (TB, 1)

    # Samples onto the lane axis: lane-dense epilogue + lane-dense output store.
    d_vec = _col_to_row(d_vec_col)                             # (1, TB)
    d_anc = _col_to_row(d_anc_col)                             # (1, TB)

    alpha = params[0:1, :]                                     # (1, TB)
    label = params[1:2, :]
    v = params[2:3, :]
    margin = params[3:4, :]

    inv_sqrt_d = jnp.float32(1.0 / (float(d_feat) ** 0.5))
    dist = (d_vec + alpha * d_anc) * inv_sqrt_d                # (1, TB)

    # `if self.v > 0.0: d = d / v` -- guard the denominator (no inf in dead branch).
    safe_v = jnp.where(v > 0.0, v, jnp.float32(1.0))
    dist = dist / safe_v

    marg = (jnp.float32(n_vectors) + alpha) * margin
    hinge = jnp.maximum(marg - dist, 0.0)
    loss = (1.0 - label) * dist * dist * 0.5 + label * hinge * hinge * 0.5
    loss_ref[0] = loss                                         # (1, TB) unmasked store


def _as_float(x):
    x = jnp.asarray(x)
    return x if jnp.issubdtype(x.dtype, jnp.floating) else x.astype(jnp.float32)


def contrastive_loss(output1, vectors, anchor, label, alpha, *, v=0.0, margin=0.9,
                     num_blocks=None):
    """Batched ContrastiveLoss forward.

    output1: (B, D)                 query embeddings
    vectors: (B, N, D) or (N, D)    reference vectors (shared across the batch if 2-D)
    anchor:  (B, D) or (D,)
    label, alpha: python scalars or (B,) arrays
    Returns a (B,) float32 loss vector (B == 1 reproduces the PyTorch module exactly).
    """
    output1 = _as_float(output1)
    if output1.ndim == 1:
        output1 = output1[None, :]
    batch, d_feat = output1.shape

    vecs = _as_float(vectors)
    shared_vectors = vecs.ndim == 2
    n_vectors = vecs.shape[-2]

    anchor = _as_float(anchor)
    if anchor.ndim == 1:
        anchor = anchor[None, :]
    if anchor.shape[0] != batch:
        anchor = jnp.broadcast_to(anchor, (batch, d_feat))

    if num_blocks is None:
        # One grid step amortizes the ~0.35us/step cost; split into two steps only
        # when the batch is large enough to feed both v7x TensorCores (harmless on
        # single-TC v5e/v6e).
        num_blocks = 2 if batch >= 16 else 1
    num_blocks = max(1, min(int(num_blocks), batch))
    tb = pl.cdiv(batch, num_blocks)
    padded = tb * num_blocks

    def pad_rows(x):
        if padded == batch:
            return x
        return jnp.pad(x, ((0, padded - batch),) + ((0, 0),) * (x.ndim - 1))

    out1_b = pad_rows(output1).reshape(num_blocks, tb, d_feat)
    anc_b = pad_rows(anchor).reshape(num_blocks, tb, d_feat)

    if shared_vectors:
        vecs_in = vecs                                                      # (N, D)
        vec_spec = pl.BlockSpec((n_vectors, d_feat), lambda i: (0, 0))      # resident
    else:
        vecs_in = pad_rows(vecs).reshape(num_blocks, tb, n_vectors, d_feat)
        vec_spec = pl.BlockSpec((1, tb, n_vectors, d_feat), lambda i: (i, 0, 0, 0))

    # Lane-aligned hyper-parameters: [alpha, label, v, margin] x samples.
    alpha_b = jnp.broadcast_to(jnp.asarray(alpha, jnp.float32).reshape(-1), (batch,))
    label_b = jnp.broadcast_to(jnp.asarray(label, jnp.float32).reshape(-1), (batch,))
    v_b = jnp.full((batch,), float(v), jnp.float32)
    m_b = jnp.full((batch,), float(margin), jnp.float32)
    params = jnp.stack([alpha_b, label_b, v_b, m_b], axis=0)                # (4, B)
    if padded != batch:
        params = jnp.pad(params, ((0, 0), (0, padded - batch)))
    params_b = params.reshape(4, num_blocks, tb).transpose(1, 0, 2)         # (nb, 4, TB)

    kernel = functools.partial(_contrastive_loss_kernel, n_vectors=n_vectors,
                               d_feat=d_feat, shared_vectors=shared_vectors)

    out = pl.pallas_call(
        kernel,
        out_shape=jax.ShapeDtypeStruct((num_blocks, 1, tb), jnp.float32),
        grid=(num_blocks,),
        in_specs=[
            pl.BlockSpec((1, 4, tb), lambda i: (i, 0, 0)),          # params (lane-aligned)
            pl.BlockSpec((1, tb, d_feat), lambda i: (i, 0, 0)),     # output1 block
            vec_spec,                                               # reference vectors
            pl.BlockSpec((1, tb, d_feat), lambda i: (i, 0, 0)),     # anchor block
        ],
        out_specs=pl.BlockSpec((1, 1, tb), lambda i: (i, 0, 0)),    # lane-dense output
        compiler_params=pltpu.CompilerParams(
            dimension_semantics=("parallel",)),  # shards blocks across TCs on v7x
    )(params_b, out1_b, vecs_in, anc_b)

    return out.reshape(padded)[:batch]


def _reference(output1, vectors, anchor, label, alpha, v=0.0, margin=0.9):
    # Pure-JAX mirror of the PyTorch forward (verification only).
    out1 = jnp.asarray(output1, jnp.float32)
    if out1.ndim == 1:
        out1 = out1[None, :]
    vecs = jnp.asarray(vectors, jnp.float32)
    if vecs.ndim == 2:
        vecs = jnp.broadcast_to(vecs[None], (out1.shape[0],) + vecs.shape)
    anc = jnp.asarray(anchor, jnp.float32)
    if anc.ndim == 1:
        anc = anc[None, :]
    anc = jnp.broadcast_to(anc, out1.shape)
    label = jnp.asarray(label, jnp.float32)
    alpha = jnp.asarray(alpha, jnp.float32)

    sd = jnp.sqrt(jnp.float32(out1.shape[1]))
    d = jnp.sum(jnp.sqrt(jnp.sum((out1[:, None, :] - vecs + _EPS) ** 2, axis=-1)),
                axis=-1) / sd
    d = d + alpha * jnp.sqrt(jnp.sum((out1 - anc + _EPS) ** 2, axis=-1)) / sd
    marg = (vecs.shape[1] + alpha) * margin
    if v > 0.0:
        d = d / v
    return (1 - label) * d ** 2 * 0.5 + label * jnp.maximum(0.0, marg - d) ** 2 * 0.5


if __name__ == "__main__":
    key = jax.random.PRNGKey(0)
    k1, k2, k3 = jax.random.split(key, 3)

    B, N, D = 8, 8, 32   # batch of samples, 8 reference vectors, feature dim 32
    output1 = 0.1 * jax.random.normal(k1, (B, D), dtype=jnp.float32)
    vectors = 0.1 * jax.random.normal(k2, (B, N, D), dtype=jnp.float32)
    anchor = 0.1 * jax.random.normal(k3, (B, D), dtype=jnp.float32)
    label = jnp.asarray([0.0, 1.0] * (B // 2), jnp.float32)   # exercise both branches
    alpha = 0.5

    # 1) Batched, per-sample reference vectors, single grid step (module defaults).
    loss = jax.block_until_ready(contrastive_loss(output1, vectors, anchor, label, alpha))
    ref = _reference(output1, vectors, anchor, label, alpha)
    assert loss.shape == (B,)
    assert jnp.allclose(loss, ref, rtol=1e-5, atol=1e-5), (loss, ref)

    # 2) Two-block grid (feeds both v7x TensorCores), shared reference set, v > 0.
    loss2 = jax.block_until_ready(
        contrastive_loss(output1, vectors[0], anchor, label, alpha, v=2.0, num_blocks=2))
    ref2 = _reference(output1, vectors[0], anchor, label, alpha, v=2.0)
    assert jnp.allclose(loss2, ref2, rtol=1e-5, atol=1e-5), (loss2, ref2)

    # 3) Single-sample (B=1) call — matches the PyTorch module's usage exactly.
    loss1 = jax.block_until_ready(
        contrastive_loss(output1[:1], vectors[0], anchor[:1], 1.0, 0.25, v=2.0, margin=0.9))
    ref1 = _reference(output1[:1], vectors[0], anchor[:1], 1.0, 0.25, v=2.0, margin=0.9)
    assert loss1.shape == (1,)
    assert jnp.allclose(loss1, ref1, rtol=1e-5, atol=1e-5), (loss1, ref1)

    # 4) bf16 inputs are DMA'd as bf16 and cast to f32 inside the kernel.
    o_bf = output1.astype(jnp.bfloat16)
    v_bf = vectors.astype(jnp.bfloat16)
    a_bf = anchor.astype(jnp.bfloat16)
    loss_bf = jax.block_until_ready(contrastive_loss(o_bf, v_bf, a_bf, label, alpha))
    ref_bf = _reference(o_bf.astype(jnp.float32), v_bf.astype(jnp.float32),
                        a_bf.astype(jnp.float32), label, alpha)
    assert jnp.allclose(loss_bf, ref_bf, rtol=1e-4, atol=1e-4), (loss_bf, ref_bf)

    print("KERNEL_OK")
</pallas_src>

<mosaic_0001>
module attributes {stable_mosaic.version = 11 : i64} {
  func.func @_contrastive_loss_kernel(%arg0: i32, %arg1: memref<1x4x8xf32, #tpu.memory_space<vmem>>, %arg2: memref<1x8x32xf32, #tpu.memory_space<vmem>>, %arg3: memref<1x8x8x32xf32, #tpu.memory_space<vmem>>, %arg4: memref<1x8x32xf32, #tpu.memory_space<vmem>>, %arg5: memref<1x1x8xf32, #tpu.memory_space<vmem>>) attributes {dimension_semantics = [#tpu.dimension_semantics<parallel>], iteration_bounds = array<i64: 1>, scalar_prefetch = 0 : i64, scratch_operands = 0 : i64, tpu.core_type = #tpu.core_type<tc>, window_params = [{transform_indices = @transform_0, window_bounds = array<i64: 1, 4, 8>}, {transform_indices = @transform_1, window_bounds = array<i64: 1, 8, 32>}, {transform_indices = @transform_2, window_bounds = array<i64: 1, 8, 8, 32>}, {transform_indices = @transform_3, window_bounds = array<i64: 1, 8, 32>}, {transform_indices = @transform_4, window_bounds = array<i64: 1, 1, 8>}]} {
    %c0 = arith.constant 0 : index
    %c0_0 = arith.constant 0 : index
    %c0_1 = arith.constant 0 : index
    %0 = vector.load %arg2[%c0, %c0_0, %c0_1] : memref<1x8x32xf32, #tpu.memory_space<vmem>>, vector<1x8x32xf32>
    %1 = vector.shape_cast %0 : vector<1x8x32xf32> to vector<8x32xf32>
    %c0_2 = arith.constant 0 : index
    %c0_3 = arith.constant 0 : index
    %c0_4 = arith.constant 0 : index
    %2 = vector.load %arg4[%c0_2, %c0_3, %c0_4] : memref<1x8x32xf32, #tpu.memory_space<vmem>>, vector<1x8x32xf32>
    %3 = vector.shape_cast %2 : vector<1x8x32xf32> to vector<8x32xf32>
    %c0_5 = arith.constant 0 : index
    %c0_6 = arith.constant 0 : index
    %c0_7 = arith.constant 0 : index
    %4 = vector.load %arg1[%c0_5, %c0_6, %c0_7] : memref<1x4x8xf32, #tpu.memory_space<vmem>>, vector<1x4x8xf32>
    %5 = vector.shape_cast %4 : vector<1x4x8xf32> to vector<4x8xf32>
    %c0_8 = arith.constant 0 : index
    %c0_9 = arith.constant 0 : index
    %c0_10 = arith.constant 0 : index
    %c0_11 = arith.constant 0 : index
    %6 = vector.load %arg3[%c0_8, %c0_9, %c0_10, %c0_11] : memref<1x8x8x32xf32, #tpu.memory_space<vmem>>, vector<1x8x8x32xf32>
    %7 = vector.shape_cast %6 : vector<1x8x8x32xf32> to vector<8x8x32xf32>
    %8 = vector.shape_cast %1 : vector<8x32xf32> to vector<8x1x32xf32>
    %9 = vector.broadcast %8 : vector<8x1x32xf32> to vector<8x8x32xf32>
    %10 = arith.subf %9, %7 : vector<8x8x32xf32>
    %cst = arith.constant 9.99999997E-7 : f32
    %11 = vector.broadcast %cst : f32 to vector<8x8x32xf32>
    %12 = arith.addf %10, %11 : vector<8x8x32xf32>
    %13 = arith.mulf %12, %12 : vector<8x8x32xf32>
    %cst_12 = arith.constant dense<0.000000e+00> : vector<8x8xf32>
    %14 = vector.multi_reduction <add>, %13, %cst_12 [2] : vector<8x8x32xf32> to vector<8x8xf32>
    %15 = math.sqrt %14 : vector<8x8xf32>
    %cst_13 = arith.constant dense<0.000000e+00> : vector<8xf32>
    %16 = vector.multi_reduction <add>, %15, %cst_13 [1] : vector<8x8xf32> to vector<8xf32>
    %17 = vector.shape_cast %16 : vector<8xf32> to vector<8x1xf32>
    %18 = arith.subf %1, %3 : vector<8x32xf32>
    %cst_14 = arith.constant 9.99999997E-7 : f32
    %19 = vector.broadcast %cst_14 : f32 to vector<8x32xf32>
    %20 = arith.addf %18, %19 : vector<8x32xf32>
    %21 = arith.mulf %20, %20 : vector<8x32xf32>
    %cst_15 = arith.constant dense<0.000000e+00> : vector<8xf32>
    %22 = vector.multi_reduction <add>, %21, %cst_15 [1] : vector<8x32xf32> to vector<8xf32>
    %23 = vector.shape_cast %22 : vector<8xf32> to vector<8x1xf32>
    %24 = math.sqrt %23 : vector<8x1xf32>
    %25 = tpu.iota {dimensions = array<i32: 0>} : vector<8x8xi32>
    %26 = tpu.iota {dimensions = array<i32: 1>} : vector<8x8xi32>
    %27 = arith.cmpi eq, %25, %26 : vector<8x8xi32>
    %cst_16 = arith.constant 0.000000e+00 : f32
    %28 = vector.shape_cast %17 : vector<8x1xf32> to vector<8x1xf32>
    %29 = vector.broadcast %28 : vector<8x1xf32> to vector<8x8xf32>
    %30 = vector.broadcast %cst_16 : f32 to vector<8x8xf32>
    %31 = arith.select %27, %29, %30 : vector<8x8xi1>, vector<8x8xf32>
    %cst_17 = arith.constant dense<0.000000e+00> : vector<8xf32>
    %32 = vector.multi_reduction <add>, %31, %cst_17 [0] : vector<8x8xf32> to vector<8xf32>
    %33 = vector.shape_cast %32 : vector<8xf32> to vector<1x8xf32>
    %34 = tpu.iota {dimensions = array<i32: 0>} : vector<8x8xi32>
    %35 = tpu.iota {dimensions = array<i32: 1>} : vector<8x8xi32>
    %36 = arith.cmpi eq, %34, %35 : vector<8x8xi32>
    %cst_18 = arith.constant 0.000000e+00 : f32
    %37 = vector.shape_cast %24 : vector<8x1xf32> to vector<8x1xf32>
    %38 = vector.broadcast %37 : vector<8x1xf32> to vector<8x8xf32>
    %39 = vector.broadcast %cst_18 : f32 to vector<8x8xf32>
    %40 = arith.select %36, %38, %39 : vector<8x8xi1>, vector<8x8xf32>
    %cst_19 = arith.constant dense<0.000000e+00> : vector<8xf32>
    %41 = vector.multi_reduction <add>, %40, %cst_19 [0] : vector<8x8xf32> to vector<8xf32>
    %42 = vector.shape_cast %41 : vector<8xf32> to vector<1x8xf32>
    %43 = vector.extract_strided_slice %5 {offsets = [0, 0], sizes = [1, 8], strides = [1, 1]} : vector<4x8xf32> to vector<1x8xf32>
    %44 = vector.extract_strided_slice %5 {offsets = [1, 0], sizes = [1, 8], strides = [1, 1]} : vector<4x8xf32> to vector<1x8xf32>
    %45 = vector.extract_strided_slice %5 {offsets = [2, 0], sizes = [1, 8], strides = [1, 1]} : vector<4x8xf32> to vector<1x8xf32>
    %46 = vector.extract_strided_slice %5 {offsets = [3, 0], sizes = [1, 8], strides = [1, 1]} : vector<4x8xf32> to vector<1x8xf32>
    %47 = arith.mulf %43, %42 : vector<1x8xf32>
    %48 = arith.addf %33, %47 : vector<1x8xf32>
    %cst_20 = arith.constant 0.176776692 : f32
    %49 = vector.broadcast %cst_20 : f32 to vector<1x8xf32>
    %50 = arith.mulf %48, %49 : vector<1x8xf32>
    %cst_21 = arith.constant 0.000000e+00 : f32
    %51 = vector.broadcast %cst_21 : f32 to vector<1x8xf32>
    %52 = arith.cmpf ogt, %45, %51 : vector<1x8xf32>
    %cst_22 = arith.constant 1.000000e+00 : f32
    %53 = vector.broadcast %cst_22 : f32 to vector<1x8xf32>
    %54 = arith.select %52, %45, %53 : vector<1x8xi1>, vector<1x8xf32>
    %55 = arith.divf %50, %54 : vector<1x8xf32>
    %cst_23 = arith.constant 8.000000e+00 : f32
    %56 = vector.broadcast %cst_23 : f32 to vector<1x8xf32>
    %57 = arith.addf %56, %43 : vector<1x8xf32>
    %58 = arith.mulf %57, %46 : vector<1x8xf32>
    %59 = arith.subf %58, %55 : vector<1x8xf32>
    %cst_24 = arith.constant 0.000000e+00 : f32
    %60 = vector.broadcast %cst_24 : f32 to vector<1x8xf32>
    %61 = arith.maximumf %59, %60 : vector<1x8xf32>
    %cst_25 = arith.constant 1.000000e+00 : f32
    %62 = vector.broadcast %cst_25 : f32 to vector<1x8xf32>
    %63 = arith.subf %62, %44 : vector<1x8xf32>
    %64 = arith.mulf %63, %55 : vector<1x8xf32>
    %65 = arith.mulf %64, %55 : vector<1x8xf32>
    %cst_26 = arith.constant 5.000000e-01 : f32
    %66 = vector.broadcast %cst_26 : f32 to vector<1x8xf32>
    %67 = arith.mulf %65, %66 : vector<1x8xf32>
    %68 = arith.mulf %44, %61 : vector<1x8xf32>
    %69 = arith.mulf %68, %61 : vector<1x8xf32>
    %cst_27 = arith.constant 5.000000e-01 : f32
    %70 = vector.broadcast %cst_27 : f32 to vector<1x8xf32>
    %71 = arith.mulf %69, %70 : vector<1x8xf32>
    %72 = arith.addf %67, %71 : vector<1x8xf32>
    %c0_28 = arith.constant 0 : index
    %c0_29 = arith.constant 0 : index
    %c0_30 = arith.constant 0 : index
    %73 = vector.load %arg5[%c0_28, %c0_29, %c0_30] : memref<1x1x8xf32, #tpu.memory_space<vmem>>, vector<1x1x8xf32>
    %74 = vector.shape_cast %73 : vector<1x1x8xf32> to vector<1x8xf32>
    %75 = vector.shape_cast %72 : vector<1x8xf32> to vector<1x1x8xf32>
    tpu.vector_store %arg5[%c0_28, %c0_29, %c0_30], %75 {strides = array<i32>} : memref<1x1x8xf32, #tpu.memory_space<vmem>>, vector<1x1x8xf32>,
    return
  }
  func.func @transform_0(%arg0: i32) -> (i32, i32, i32) {
    %c0_i32 = arith.constant 0 : i32
    %c0_i32_0 = arith.constant 0 : i32
    %c0_i32_1 = arith.constant 0 : i32
    return %arg0, %c0_i32, %c0_i32_0 : i32, i32, i32
  }
  func.func @transform_1(%arg0: i32) -> (i32, i32, i32) {
    %c0_i32 = arith.constant 0 : i32
    %c0_i32_0 = arith.constant 0 : i32
    %c0_i32_1 = arith.constant 0 : i32
    return %arg0, %c0_i32, %c0_i32_0 : i32, i32, i32
  }
  func.func @transform_2(%arg0: i32) -> (i32, i32, i32, i32) {
    %c0_i32 = arith.constant 0 : i32
    %c0_i32_0 = arith.constant 0 : i32
    %c0_i32_1 = arith.constant 0 : i32
    %c0_i32_2 = arith.constant 0 : i32
    return %arg0, %c0_i32, %c0_i32_0, %c0_i32_1 : i32, i32, i32, i32
  }
  func.func @transform_3(%arg0: i32) -> (i32, i32, i32) {
    %c0_i32 = arith.constant 0 : i32
    %c0_i32_0 = arith.constant 0 : i32
    %c0_i32_1 = arith.constant 0 : i32
    return %arg0, %c0_i32, %c0_i32_0 : i32, i32, i32
  }
  func.func @transform_4(%arg0: i32) -> (i32, i32, i32) {
    %c0_i32 = arith.constant 0 : i32
    %c0_i32_0 = arith.constant 0 : i32
    %c0_i32_1 = arith.constant 0 : i32
    return %arg0, %c0_i32, %c0_i32_0 : i32, i32, i32
  }
}

</mosaic_0001>

<llo_original>
// kernel: tpu_custom_call.1
$region0: #{tpu_custom_call.1}
  #allocation0 [shape = 'u32[]', space=smem, size = 0x4, offset = 0x4, fixed_abs, tag = 'smem constant byte address 0x4 - core index']
  #allocation1 [shape = 'u32[72,128]{1,0:T(1,128)}', space=vmem, size = 0x9000, scoped, tag = 'internal scratch']
  %s0 = inlined_call_operand.hbm [shape: f32[1,4,8], index: 0, kind: input, shape index: {}]
  %s1 = inlined_call_operand.hbm [shape: f32[1,8,32], index: 1, kind: input, shape index: {}]
  %s2 = inlined_call_operand.hbm [shape: f32[1,8,8,32], index: 2, kind: input, shape index: {}]
  %s3 = inlined_call_operand.hbm [shape: f32[1,8,32], index: 3, kind: input, shape index: {}]
  %s4 = inlined_call_operand.hbm [shape: f32[1,1,8], index: 4, kind: output, shape index: {}]
  %s5 = sld [smem:[#allocation0]]
  $region42: #{tpu_custom_call.1} parent=0
    _
  %s7 = ssub.s32 1, %s5
  %s8 = scalar_select 0, %s7, %s5
  $region1: #{tpu_custom_call.1} parent=0
    #allocation2 [shape = 'u8[2048]{0}', space=vmem, size = 0x800, scoped, tag = 'input window, operand 0, single buffered']
    #allocation3 [shape = 's32[1]{0}', space=sflag, size = 0x4, scoped, tag = 'scoped memory for tpu_custom_call.1']
    #allocation4 [shape = 's32[1]{0}', space=sflag, size = 0x4, scoped, tag = 'scoped memory for tpu_custom_call.1']
    #allocation5 [shape = 'u8[4096]{0}', space=vmem, size = 0x1000, scoped, tag = 'input window, operand 1, single buffered']
    #allocation6 [shape = 's32[1]{0}', space=sflag, size = 0x4, scoped, tag = 'scoped memory for tpu_custom_call.1']
    #allocation7 [shape = 'u8[32768]{0}', space=vmem, size = 0x8000, scoped, tag = 'input window, operand 2, single buffered']
    #allocation8 [shape = 'u8[4096]{0}', space=vmem, size = 0x1000, scoped, tag = 'input window, operand 3, single buffered']
    #allocation9 [shape = 's32[1]{0}', space=sflag, size = 0x4, scoped, tag = 'scoped memory for tpu_custom_call.1']
    #allocation10 [shape = 'u8[512]{0}', space=vmem, size = 0x400, scoped, tag = 'output window, operand 0, single buffered']
    %9 = vsyncpa [#allocation3], 0
    %10 = vsyncpa [#allocation6], 0
    %11 = vsyncpa [#allocation9], 0
    %12 = vsyncpa [#allocation4], 0
    // Predicated region
    $region2: #{tpu_custom_call.1} parent=1 // pred_check
      _
    $region3: #{tpu_custom_call.1} parent=1 // pred_check_branch
      %14 = sbr.rel (0) target = $region5
    $region4: #{tpu_custom_call.1} parent=1 // pred_region
      %16 = vsyncadd [#allocation3], 0
      %s18 = sshll.u32 %s0, 4
      %s19 = int_to_ptr.hbm [resolvable:$true] %s18
      %s20 = sshll.u32 [#allocation2], 4
      %s21 = int_to_ptr.vmem [resolvable:$true] %s20
      %23 = dma.hbm_to_vmem [thread:$0]  %s19, 64, %s21, [#allocation3]
    $region5: #{tpu_custom_call.1} parent=1 // pred_fallthru
      _
    // Predicated region
    $region6: #{tpu_custom_call.1} parent=1 // pred_check
      _
    $region7: #{tpu_custom_call.1} parent=1 // pred_check_branch
      %25 = sbr.rel (0) target = $region9
    $region8: #{tpu_custom_call.1} parent=1 // pred_region
      %27 = vsyncadd [#allocation6], 0
      %s29 = sshll.u32 %s1, 4
      %s30 = int_to_ptr.hbm [resolvable:$true] %s29
      %s31 = sshll.u32 [#allocation5], 4
      %s32 = int_to_ptr.vmem [resolvable:$true] %s31
      %34 = dma.hbm_to_vmem [thread:$0]  %s30, 128, %s32, [#allocation6]
    $region9: #{tpu_custom_call.1} parent=1 // pred_fallthru
      _
    // Predicated region
    $region10: #{tpu_custom_call.1} parent=1 // pred_check
      _
    $region11: #{tpu_custom_call.1} parent=1 // pred_check_branch
      %36 = sbr.rel (0) target = $region13
    $region12: #{tpu_custom_call.1} parent=1 // pred_region
      %38 = vsyncadd [#allocation6], 0
      %s39 = sshll.u32 %s2, 4
      %s40 = int_to_ptr.hbm [resolvable:$true] %s39
      %s41 = sshll.u32 [#allocation7], 4
      %s42 = int_to_ptr.vmem [resolvable:$true] %s41
      %47 = dma.hbm_to_vmem [thread:$0]  %s40, 1024, %s42, [#allocation6], 128, 128, 8
    $region13: #{tpu_custom_call.1} parent=1 // pred_fallthru
      _
    // Predicated region
    $region14: #{tpu_custom_call.1} parent=1 // pred_check
      _
    $region15: #{tpu_custom_call.1} parent=1 // pred_check_branch
      %49 = sbr.rel (0) target = $region17
    $region16: #{tpu_custom_call.1} parent=1 // pred_region
      %51 = vsyncadd [#allocation9], 0
      %s53 = sshll.u32 %s3, 4
      %s54 = int_to_ptr.hbm [resolvable:$true] %s53
      %s55 = sshll.u32 [#allocation8], 4
      %s56 = int_to_ptr.vmem [resolvable:$true] %s55
      %58 = dma.hbm_to_vmem [thread:$0]  %s54, 128, %s56, [#allocation9]
    $region17: #{tpu_custom_call.1} parent=1 // pred_fallthru
      _
    // Predicated region
    $region18: #{tpu_custom_call.1} parent=1 // pred_check
      _
    $region19: #{tpu_custom_call.1} parent=1 // pred_check_branch
      %60 = sbr.rel (0) target = $region21
    $region20: #{tpu_custom_call.1} parent=1 // pred_region
      %62 = dma.done [#allocation3], 64
    $region21: #{tpu_custom_call.1} parent=1 // pred_fallthru
      _
    // Predicated region
    $region22: #{tpu_custom_call.1} parent=1 // pred_check
      _
    $region23: #{tpu_custom_call.1} parent=1 // pred_check_branch
      %64 = sbr.rel (0) target = $region25
    $region24: #{tpu_custom_call.1} parent=1 // pred_region
      %66 = dma.done [#allocation6], 128
    $region25: #{tpu_custom_call.1} parent=1 // pred_fallthru
      _
    // Predicated region
    $region26: #{tpu_custom_call.1} parent=1 // pred_check
      _
    $region27: #{tpu_custom_call.1} parent=1 // pred_check_branch
      %68 = sbr.rel (0) target = $region29
    $region28: #{tpu_custom_call.1} parent=1 // pred_region
      %70 = dma.done [#allocation6], 1024
    $region29: #{tpu_custom_call.1} parent=1 // pred_fallthru
      _
    // Predicated region
    $region30: #{tpu_custom_call.1} parent=1 // pred_check
      _
    $region31: #{tpu_custom_call.1} parent=1 // pred_check_branch
      %72 = sbr.rel (0) target = $region33
    $region32: #{tpu_custom_call.1} parent=1 // pred_region
      %74 = dma.done [#allocation9], 128
    $region33: #{tpu_custom_call.1} parent=1 // pred_fallthru
      _
    %v75 = vld [vmem:[#allocation5] sm:$0xff]
    %v76 = vld [vmem:[#allocation8] sm:$0xff]
    %v77 = vld [vmem:[#allocation2] sm:$0xf]
    %v78 = vld [vmem:[#allocation7] sm:$0xff]
    %v79 = vld [vmem:[#allocation7 + $0x8] sm:$0xff]
    %v80 = vld [vmem:[#allocation7 + $0x10] sm:$0xff]
    %v81 = vld [vmem:[#allocation7 + $0x18] sm:$0xff]
    %v82 = vld [vmem:[#allocation7 + $0x20] sm:$0xff]
    %v83 = vld [vmem:[#allocation7 + $0x28] sm:$0xff]
    %v84 = vld [vmem:[#allocation7 + $0x30] sm:$0xff]
    %v85 = vld [vmem:[#allocation7 + $0x38] sm:$0xff]
    %v87 = vrot.slane %v75, 1
    %v88 = vrot.slane %v75, 2
    %v89 = vrot.slane %v75, 3
    %v90 = vrot.slane %v75, 4
    %v91 = vrot.slane %v75, 5
    %v92 = vrot.slane %v75, 6
    %v93 = vrot.slane %v75, 7
    %v94 = vperm.slane %v75, 0
    %v95 = vperm.slane %v87, 0
    %v96 = vperm.slane %v88, 0
    %v97 = vperm.slane %v89, 0
    %v98 = vperm.slane %v90, 0
    %v99 = vperm.slane %v91, 0
    %v100 = vperm.slane %v92, 0
    %v101 = vperm.slane %v93, 0
    %v110 = vsub.f32 %v94, %v78
    %v111 = vsub.f32 %v95, %v79
    %v112 = vsub.f32 %v96, %v80
    %v113 = vsub.f32 %v97, %v81
    %v114 = vsub.f32 %v98, %v82
    %v115 = vsub.f32 %v99, %v83
    %v116 = vsub.f32 %v100, %v84
    %v117 = vsub.f32 %v101, %v85
    %v118 = vadd.f32 %v110, 1e-06
    %v119 = vadd.f32 %v111, 1e-06
    %v120 = vadd.f32 %v112, 1e-06
    %v121 = vadd.f32 %v113, 1e-06
    %v122 = vadd.f32 %v114, 1e-06
    %v123 = vadd.f32 %v115, 1e-06
    %v124 = vadd.f32 %v116, 1e-06
    %v125 = vadd.f32 %v117, 1e-06
    %v126 = vmul.f32 %v118, %v118
    %v127 = vmul.f32 %v119, %v119
    %v128 = vmul.f32 %v120, %v120
    %v129 = vmul.f32 %v121, %v121
    %v130 = vmul.f32 %v122, %v122
    %v131 = vmul.f32 %v123, %v123
    %v132 = vmul.f32 %v124, %v124
    %v133 = vmul.f32 %v125, %v125
    %vm134 = vcmask 261120
    %v135 = vsel %vm134, %v126, 0.0
    %136 = vadd.xlane.f32.xlu0 %v135
    %v137 = vpop.xlane.xlu0 %136
    %v138 = vsel %vm134, %v127, 0.0
    %139 = vadd.xlane.f32.xlu0 %v138
    %v140 = vpop.xlane.xlu0 %139
    %v141 = vsel %vm134, %v128, 0.0
    %142 = vadd.xlane.f32.xlu0 %v141
    %v143 = vpop.xlane.xlu0 %142
    %v144 = vsel %vm134, %v129, 0.0
    %145 = vadd.xlane.f32.xlu0 %v144
    %v146 = vpop.xlane.xlu0 %145
    %v147 = vsel %vm134, %v130, 0.0
    %148 = vadd.xlane.f32.xlu0 %v147
    %v149 = vpop.xlane.xlu0 %148
    %v150 = vsel %vm134, %v131, 0.0
    %151 = vadd.xlane.f32.xlu0 %v150
    %v152 = vpop.xlane.xlu0 %151
    %v153 = vsel %vm134, %v132, 0.0
    %154 = vadd.xlane.f32.xlu0 %v153
    %v155 = vpop.xlane.xlu0 %154
    %v156 = vsel %vm134, %v133, 0.0
    %157 = vadd.xlane.f32.xlu0 %v156
    %v158 = vpop.xlane.xlu0 %157
    %v159 = vrsqrt.pop %v137
    %v160 = vmul.f32 %v159, %v137
    %v161 = vmul.f32 %v160, %v159
    %v162 = vmul.f32 0.5, %v161
    %v163 = vsub.f32 1.5, %v162
    %v164 = vmul.f32 %v159, %v163
    %v165 = vmul.f32 %v137, %v164
    %vm166 = vcmp.eq.f32.partialorder %v137, inf
    %v167 = vsel %vm166, %v137, %v165
    %vm168 = vcmp.eq.f32.partialorder %v137, 0.0
    %v169 = vand.u32 %v137, 2147483648
    %v170 = vsel %vm168, %v169, %v167
    %v171 = vrsqrt.pop %v140
    %v172 = vmul.f32 %v171, %v140
    %v173 = vmul.f32 %v172, %v171
    %v174 = vmul.f32 0.5, %v173
    %v175 = vsub.f32 1.5, %v174
    %v176 = vmul.f32 %v171, %v175
    %v177 = vmul.f32 %v140, %v176
    %vm178 = vcmp.eq.f32.partialorder %v140, inf
    %v179 = vsel %vm178, %v140, %v177
    %vm180 = vcmp.eq.f32.partialorder %v140, 0.0
    %v181 = vand.u32 %v140, 2147483648
    %v182 = vsel %vm180, %v181, %v179
    %v183 = vrsqrt.pop %v143
    %v184 = vmul.f32 %v183, %v143
    %v185 = vmul.f32 %v184, %v183
    %v186 = vmul.f32 0.5, %v185
    %v187 = vsub.f32 1.5, %v186
    %v188 = vmul.f32 %v183, %v187
    %v189 = vmul.f32 %v143, %v188
    %vm190 = vcmp.eq.f32.partialorder %v143, inf
    %v191 = vsel %vm190, %v143, %v189
    %vm192 = vcmp.eq.f32.partialorder %v143, 0.0
    %v193 = vand.u32 %v143, 2147483648
    %v194 = vsel %vm192, %v193, %v191
    %v195 = vrsqrt.pop %v146
    %v196 = vmul.f32 %v195, %v146
    %v197 = vmul.f32 %v196, %v195
    %v198 = vmul.f32 0.5, %v197
    %v199 = vsub.f32 1.5, %v198
    %v200 = vmul.f32 %v195, %v199
    %v201 = vmul.f32 %v146, %v200
    %vm202 = vcmp.eq.f32.partialorder %v146, inf
    %v203 = vsel %vm202, %v146, %v201
    %vm204 = vcmp.eq.f32.partialorder %v146, 0.0
    %v205 = vand.u32 %v146, 2147483648
    %v206 = vsel %vm204, %v205, %v203
    %v207 = vrsqrt.pop %v149
    %v208 = vmul.f32 %v207, %v149
    %v209 = vmul.f32 %v208, %v207
    %v210 = vmul.f32 0.5, %v209
    %v211 = vsub.f32 1.5, %v210
    %v212 = vmul.f32 %v207, %v211
    %v213 = vmul.f32 %v149, %v212
    %vm214 = vcmp.eq.f32.partialorder %v149, inf
    %v215 = vsel %vm214, %v149, %v213
    %vm216 = vcmp.eq.f32.partialorder %v149, 0.0
    %v217 = vand.u32 %v149, 2147483648
    %v218 = vsel %vm216, %v217, %v215
    %v219 = vrsqrt.pop %v152
    %v220 = vmul.f32 %v219, %v152
    %v221 = vmul.f32 %v220, %v219
    %v222 = vmul.f32 0.5, %v221
    %v223 = vsub.f32 1.5, %v222
    %v224 = vmul.f32 %v219, %v223
    %v225 = vmul.f32 %v152, %v224
    %vm226 = vcmp.eq.f32.partialorder %v152, inf
    %v227 = vsel %vm226, %v152, %v225
    %vm228 = vcmp.eq.f32.partialorder %v152, 0.0
    %v229 = vand.u32 %v152, 2147483648
    %v230 = vsel %vm228, %v229, %v227
    %v231 = vrsqrt.pop %v155
    %v232 = vmul.f32 %v231, %v155
    %v233 = vmul.f32 %v232, %v231
    %v234 = vmul.f32 0.5, %v233
    %v235 = vsub.f32 1.5, %v234
    %v236 = vmul.f32 %v231, %v235
    %v237 = vmul.f32 %v155, %v236
    %vm238 = vcmp.eq.f32.partialorder %v155, inf
    %v239 = vsel %vm238, %v155, %v237
    %vm240 = vcmp.eq.f32.partialorder %v155, 0.0
    %v241 = vand.u32 %v155, 2147483648
    %v242 = vsel %vm240, %v241, %v239
    %v243 = vrsqrt.pop %v158
    %v244 = vmul.f32 %v243, %v158
    %v245 = vmul.f32 %v244, %v243
    %v246 = vmul.f32 0.5, %v245
    %v247 = vsub.f32 1.5, %v246
    %v248 = vmul.f32 %v243, %v247
    %v249 = vmul.f32 %v158, %v248
    %vm250 = vcmp.eq.f32.partialorder %v158, inf
    %v251 = vsel %vm250, %v158, %v249
    %vm252 = vcmp.eq.f32.partialorder %v158, 0.0
    %v253 = vand.u32 %v158, 2147483648
    %v254 = vsel %vm252, %v253, %v251
    %v263 = vlaneseq
    %v264 = vand.u32 %v263, 127
    %v265 = vperm.slane %v170, %v264
    %v266 = vperm.slane %v182, %v264
    %v267 = vperm.slane %v194, %v264
    %v268 = vperm.slane %v206, %v264
    %v269 = vperm.slane %v218, %v264
    %v270 = vperm.slane %v230, %v264
    %v271 = vperm.slane %v242, %v264
    %v272 = vperm.slane %v254, %v264
    %vm273 = vcmask 1041409
    %v274 = vsel %vm273, %v266, %v265
    %vm275 = vcmask 1042434
    %v276 = vsel %vm275, %v267, %v274
    %vm277 = vcmask 1043459
    %v278 = vsel %vm277, %v268, %v276
    %vm279 = vcmask 1044484
    %v280 = vsel %vm279, %v269, %v278
    %vm281 = vcmask 1045509
    %v282 = vsel %vm281, %v270, %v280
    %vm283 = vcmask 1046534
    %v284 = vsel %vm283, %v271, %v282
    %vm285 = vcmask 1047559
    %v286 = vsel %vm285, %v272, %v284
    %vm288 = vcmask 64512
    %v289 = vsel %vm288, %v286, 0.0
    %290 = vadd.xlane.f32.xlu0 %v289
    %v291 = vpop.xlane.xlu0 %290
    %v292 = vsub.f32 %v75, %v76
    %v293 = vadd.f32 %v292, 1e-06
    %v294 = vmul.f32 %v293, %v293
    %v295 = vsel %vm134, %v294, 0.0
    %296 = vadd.xlane.f32.xlu0 %v295
    %v297 = vpop.xlane.xlu0 %296
    %v298 = vrsqrt.pop %v297
    %v299 = vmul.f32 %v298, %v297
    %v300 = vmul.f32 %v299, %v298
    %v301 = vmul.f32 0.5, %v300
    %v302 = vsub.f32 1.5, %v301
    %v303 = vmul.f32 %v298, %v302
    %v304 = vmul.f32 %v297, %v303
    %vm305 = vcmp.eq.f32.partialorder %v297, inf
    %v306 = vsel %vm305, %v297, %v304
    %vm307 = vcmp.eq.f32.partialorder %v297, 0.0
    %v308 = vand.u32 %v297, 2147483648
    %v309 = vsel %vm307, %v308, %v306
    %v310 = vlaneseq
    %v311 = vshrl.u32 %v310, 7
    %vm312 = vcmp.eq.s32.totalorder %v311, %v264
    %v313 = vsel %vm312, %v291, 0.0
    %v314 = vsel %vm288, %v313, 0.0
    %v315 = vrot.slane %v314, 4
    %v316 = vadd.f32 %v314, %v315
    %v317 = vrot.slane %v316, 2
    %v318 = vadd.f32 %v316, %v317
    %v319 = vrot.slane %v318, 1
    %v320 = vadd.f32 %v318, %v319
    %v321 = vsel %vm312, %v309, 0.0
    %v322 = vsel %vm288, %v321, 0.0
    %v323 = vrot.slane %v322, 4
    %v324 = vadd.f32 %v322, %v323
    %v325 = vrot.slane %v324, 2
    %v326 = vadd.f32 %v324, %v325
    %v327 = vrot.slane %v326, 1
    %v328 = vadd.f32 %v326, %v327
    %v329 = vmul.f32 %v77, %v328
    %v330 = vadd.f32 %v320, %v329
    %v331 = vmul.f32 %v330, 0.17677669
    %vm332 = vcmp.gt.f32.partialorder %v77, 0.0
    %v333 = vsel %vm332, %v77, 1.0
    %v335 = vrot.slane %v333, 2
    %v337 = vrcp.pop %v335
    %v338 = vmul.f32 %v335, %v337
    %v339 = vsub.f32 1.0, %v338
    %v340 = vmul.f32 %v337, %v339
    %v341 = vadd.f32 %v337, %v340
    %vm342 = vweird.f32 %v335
    %vm343 = vweird.f32 %v337
    %vm344 = vmor %vm342, %vm343
    %v345 = vsel %vm344, %v337, %v341
    %v346 = vand.u32 2147483647, %v335
    %vm347 = vcmp.eq.f32.partialorder %v346, 8.507059e+37
    %v348 = vand.u32 %v335, 2147483648
    %v349 = vor.u32 1.1754944e-38, %v348
    %v350 = vsel %vm347, %v349, %v345
    %v351 = vmul.f32 %v331, %v350
    %v352 = vadd.f32 %v77, 8.0
    %v354 = vrot.slane %v77, 3
    %v356 = vmul.f32 %v352, %v354
    %v357 = vsub.f32 %v356, %v351
    %v358 = vmax.f32 %v357, 0.0
    %v359 = vsub.f32 1.0, %v77
    %v361 = vrot.slane %v351, 7
    %v363 = vmul.f32 %v359, %v361
    %v364 = vmul.f32 %v363, %v361
    %v365 = vmul.f32 %v364, 0.5
    %v367 = vrot.slane %v358, 7
    %v369 = vmul.f32 %v77, %v367
    %v370 = vmul.f32 %v369, %v367
    %v371 = vmul.f32 %v370, 0.5
    %v372 = vadd.f32 %v365, %v371
    %vm373 = vcmask 58369
    %374 = vst.msk [vmem:[#allocation10 - $0x1] sm:$0x2] %vm373, %v372
    // Predicated region
    $region34: #{tpu_custom_call.1} parent=1 // pred_check
      _
    $region35: #{tpu_custom_call.1} parent=1 // pred_check_branch
      %376 = sbr.rel (0) target = $region37
    $region36: #{tpu_custom_call.1} parent=1 // pred_region
      %378 = vsyncadd [#allocation4], 0
      %s380 = sshll.u32 [#allocation10], 4
      %s381 = int_to_ptr.vmem [resolvable:$true] %s380
      %s382 = sshll.u32 %s4, 4
      %s383 = int_to_ptr.hbm [resolvable:$true] %s382
      %385 = dma.vmem_to_hbm [thread:$0]  %s381, 16, %s383, [#allocation4]
    $region37: #{tpu_custom_call.1} parent=1 // pred_fallthru
      _
    // Predicated region
    $region38: #{tpu_custom_call.1} parent=1 // pred_check
      _
    $region39: #{tpu_custom_call.1} parent=1 // pred_check_branch
      %387 = sbr.rel (0) target = $region41
    $region40: #{tpu_custom_call.1} parent=1 // pred_region
      %389 = dma.done [#allocation4], 16
    $region41: #{tpu_custom_call.1} parent=1 // pred_fallthru
      _
    %390 = vsyncpa [#allocation3], 1
    %391 = vsyncpa [#allocation6], 1
    %392 = vsyncpa [#allocation9], 1
    %393 = vsyncpa [#allocation4], 1

</llo_original>
